<compile_context>
chip_gen: v7x
topology: tpu7x:2x2x1
jax: 0.10.0
libtpu: 0.0.40
codegen_flags: <defaults>
</compile_context>

<pallas_src>
import math
import functools

import jax
import jax.numpy as jnp
from jax.experimental import pallas as pl
from jax.experimental.pallas import tpu as pltpu


# --------------------------------------------------------------------------- #
# Kernel 1: QKV projection  [b, s, h] -> q/k/v in [b, n, s, hn] (bf16)
# --------------------------------------------------------------------------- #
def _qkv_proj_kernel(x_ref, wqkv_ref, bqkv_ref, q_ref, k_ref, v_ref, *, scale):
    n, ts, hn = q_ref.shape[1], q_ref.shape[2], q_ref.shape[3]
    x = x_ref[0]                                                      # [ts, h] bf16
    q = jnp.dot(x, wqkv_ref[0], preferred_element_type=jnp.float32) + bqkv_ref[0]
    k = jnp.dot(x, wqkv_ref[1], preferred_element_type=jnp.float32) + bqkv_ref[1]
    v = jnp.dot(x, wqkv_ref[2], preferred_element_type=jnp.float32) + bqkv_ref[2]
    q = q * scale                                                     # fold 1/sqrt(hn) into Q (f32)

    def to_heads(t):                                                  # [ts, h] -> [n, ts, hn]
        return jnp.transpose(t.reshape(ts, n, hn), (1, 0, 2)).astype(jnp.bfloat16)

    q_ref[0] = to_heads(q)
    k_ref[0] = to_heads(k)
    v_ref[0] = to_heads(v)


# --------------------------------------------------------------------------- #
# Kernel 2: flash attention (online softmax, causal tile skipping)
# --------------------------------------------------------------------------- #
def _flash_attn_kernel(q_ref, k_ref, v_ref, o_ref, m_scr, l_scr, acc_scr):
    qi = pl.program_id(1)
    ki = pl.program_id(2)
    nk = pl.num_programs(2)
    n, tq, hn = q_ref.shape[1], q_ref.shape[2], q_ref.shape[3]
    tk = k_ref.shape[2]

    @pl.when(ki == 0)
    def _init():
        m_scr[...] = jnp.full_like(m_scr, -jnp.inf)
        l_scr[...] = jnp.zeros_like(l_scr)
        acc_scr[...] = jnp.zeros_like(acc_scr)

    # Causal tile skipping: kv tiles strictly above the diagonal do no work.
    @pl.when(ki * tk <= qi * tq + (tq - 1))
    def _compute():
        q = q_ref[0]                                                  # [n, tq, hn] bf16
        k = k_ref[0]                                                  # [n, tk, hn] bf16
        v = v_ref[0]                                                  # [n, tk, hn] bf16

        # Batched-head scores [n, tq, tk] (contraction over head_dim, no explicit k.T).
        scores = jnp.einsum('nqd,nkd->nqk', q, k,
                            preferred_element_type=jnp.float32)

        # On-chip causal (ltor) mask via iota: keep if global_row >= global_col.
        row = qi * tq + jax.lax.broadcasted_iota(jnp.int32, (tq, tk), 0)
        col = ki * tk + jax.lax.broadcasted_iota(jnp.int32, (tq, tk), 1)
        scores = jnp.where((row >= col)[None, :, :], scores, -10000.0)

        # Online (flash-style) softmax accumulation across kv tiles, all in f32.
        m_prev = m_scr[...]                                           # [n, tq, 1]
        m_new = jnp.maximum(m_prev, jnp.max(scores, axis=-1, keepdims=True))
        alpha = jnp.exp(m_prev - m_new)
        p = jnp.exp(scores - m_new)                                   # [n, tq, tk]
        l_scr[...] = alpha * l_scr[...] + jnp.sum(p, axis=-1, keepdims=True)
        pv = jnp.einsum('nqk,nkd->nqd', p.astype(jnp.bfloat16), v,
                        preferred_element_type=jnp.float32)           # [n, tq, hn]
        acc_scr[...] = alpha * acc_scr[...] + pv
        m_scr[...] = m_new

    @pl.when(ki == nk - 1)
    def _finalize():
        inv_l = pl.reciprocal(l_scr[...], approx=True)                # EUP reciprocal
        ctx = acc_scr[...] * inv_l                                    # [n, tq, hn] f32
        ctx = jnp.transpose(ctx, (1, 0, 2)).reshape(tq, n * hn)       # head concat -> [tq, h]
        o_ref[0] = ctx.astype(o_ref.dtype)


# --------------------------------------------------------------------------- #
# Kernel 3: output (dense) projection  context @ W_dense^T + b_dense
# --------------------------------------------------------------------------- #
def _dense_kernel(ctx_ref, w_ref, b_ref, o_ref):
    out = jnp.dot(ctx_ref[0], w_ref[...],
                  preferred_element_type=jnp.float32) + b_ref[0]
    o_ref[0] = out.astype(o_ref.dtype)


# --------------------------------------------------------------------------- #
# Host-side helpers
# --------------------------------------------------------------------------- #
def _preferred_tiles():
    """Per-generation (tq, tk) preferences; defaults are safe everywhere."""
    try:
        kind = jax.devices()[0].device_kind.lower()
    except Exception:
        kind = ""
    if "v5" in kind and ("lite" in kind or "5e" in kind):
        return 128, 256        # v5e: 128x128 MXU, smaller f32 score temporaries
    if "v6" in kind:
        return 256, 512        # v6e: 2x256x256 MXU, 128 MiB VMEM
    return 256, 256            # v7x (64 MiB VMEM per TC) and default


def _choose_tile(dim, preferred, step=8):
    """Largest multiple of `step` <= preferred that evenly divides dim."""
    if dim <= preferred:
        return dim
    t = (preferred // step) * step
    while t >= step:
        if dim % t == 0:
            return t
        t -= step
    # TODO(synk): ragged sequence lengths would need in-kernel tail masking.
    return dim


def prepare_params(params):
    """One-time init: pre-transpose weights to [in, out] layout and pre-cast to bf16."""
    w_qkv = params["w_qkv"]          # [3h, h]  (out, in), rows ordered [q; k; v]
    b_qkv = params["b_qkv"]          # [3h]
    w_dense = params["w_dense"]      # [h, h]   (out, in)
    b_dense = params["b_dense"]      # [h]
    h = w_qkv.shape[1]
    # [3h, h] -> [3, h_out, h_in] -> [3, h_in, h_out]  so the kernel does  x @ W[i].
    w_qkv3 = jnp.transpose(w_qkv.reshape(3, h, h), (0, 2, 1)).astype(jnp.bfloat16)
    return {
        "w_qkv3": w_qkv3,                                        # [3, h, h] bf16
        "b_qkv3": b_qkv.reshape(3, h).astype(jnp.float32),       # [3, h]    f32
        "w_dense_t": w_dense.T.astype(jnp.bfloat16),             # [h, h]    bf16
        "b_dense": b_dense.reshape(1, h).astype(jnp.float32),    # [1, h]    f32
    }


def gpt2_parallel_self_attention(hidden_states, ltor_mask, kernel_params,
                                 num_attention_heads):
    """hidden_states: [b, s, h]; ltor_mask accepted for API parity (the causal
    mask is generated on-chip)."""
    del ltor_mask  # TODO(synk): assumed to be the standard lower-triangular mask.
    b, s, h = hidden_states.shape
    n = num_attention_heads
    hn = h // n
    scale = 1.0 / math.sqrt(hn)

    x = hidden_states.astype(jnp.bfloat16)       # bf16 activations -> half the DMA

    tq_pref, tk_pref = _preferred_tiles()
    ts = _choose_tile(s, 256)                    # projection / dense row tile
    tq = _choose_tile(s, tq_pref)                # query tile
    tk = _choose_tile(s, tk_pref)                # kv tile

    # ---- 1) QKV projection: [b, s, h] -> q/k/v in [b, n, s, hn] bf16 (done ONCE) ----
    qkv_shape = jax.ShapeDtypeStruct((b, n, s, hn), jnp.bfloat16)
    q, k, v = pl.pallas_call(
        functools.partial(_qkv_proj_kernel, scale=scale),
        out_shape=(qkv_shape, qkv_shape, qkv_shape),
        grid=(b, s // ts),
        in_specs=[
            pl.BlockSpec((1, ts, h), lambda bi, si: (bi, si, 0)),   # x tile (bf16)
            pl.BlockSpec((3, h, h), lambda bi, si: (0, 0, 0)),      # W_qkv  [q,k,v]
            pl.BlockSpec((3, h), lambda bi, si: (0, 0)),            # b_qkv  [q,k,v]
        ],
        out_specs=(
            pl.BlockSpec((1, n, ts, hn), lambda bi, si: (bi, 0, si, 0)),
            pl.BlockSpec((1, n, ts, hn), lambda bi, si: (bi, 0, si, 0)),
            pl.BlockSpec((1, n, ts, hn), lambda bi, si: (bi, 0, si, 0)),
        ),
        compiler_params=pltpu.CompilerParams(
            dimension_semantics=("parallel", "parallel"),
            vmem_limit_bytes=48 * 1024 * 1024,
        ),
    )(x, kernel_params["w_qkv3"], kernel_params["b_qkv3"])

    # ---- 2) flash attention: q/k/v -> context [b, s, h] bf16 (no weights in VMEM) ----
    ctx = pl.pallas_call(
        _flash_attn_kernel,
        out_shape=jax.ShapeDtypeStruct((b, s, h), jnp.bfloat16),
        grid=(b, s // tq, s // tk),
        in_specs=[
            pl.BlockSpec((1, n, tq, hn), lambda bi, qi, ki: (bi, 0, qi, 0)),  # Q tile
            pl.BlockSpec((1, n, tk, hn), lambda bi, qi, ki: (bi, 0, ki, 0)),  # K tile
            pl.BlockSpec((1, n, tk, hn), lambda bi, qi, ki: (bi, 0, ki, 0)),  # V tile
        ],
        out_specs=pl.BlockSpec((1, tq, h), lambda bi, qi, ki: (bi, qi, 0)),
        scratch_shapes=[
            pltpu.VMEM((n, tq, 1), jnp.float32),    # running max
            pltpu.VMEM((n, tq, 1), jnp.float32),    # running denom
            pltpu.VMEM((n, tq, hn), jnp.float32),   # ctx accumulator
        ],
        compiler_params=pltpu.CompilerParams(
            dimension_semantics=("parallel", "parallel", "arbitrary"),
            vmem_limit_bytes=40 * 1024 * 1024,
        ),
    )(q, k, v)

    # ---- 3) output (dense) projection: context @ W_dense^T + b_dense ----
    out = pl.pallas_call(
        _dense_kernel,
        out_shape=jax.ShapeDtypeStruct((b, s, h), hidden_states.dtype),
        grid=(b, s // ts),
        in_specs=[
            pl.BlockSpec((1, ts, h), lambda bi, si: (bi, si, 0)),   # context tile
            pl.BlockSpec((h, h), lambda bi, si: (0, 0)),            # W_dense^T
            pl.BlockSpec((1, h), lambda bi, si: (0, 0)),            # b_dense
        ],
        out_specs=pl.BlockSpec((1, ts, h), lambda bi, si: (bi, si, 0)),
        compiler_params=pltpu.CompilerParams(
            dimension_semantics=("parallel", "parallel"),
            vmem_limit_bytes=32 * 1024 * 1024,
        ),
    )(ctx, kernel_params["w_dense_t"], kernel_params["b_dense"])

    return out


# --------------------------------------------------------------------------- #
# Pure-JAX reference (mirrors the PyTorch module)
# --------------------------------------------------------------------------- #
def _reference(hidden_states, ltor_mask, params, num_heads):
    b, s, h = hidden_states.shape
    hn = h // num_heads
    qkv = jnp.einsum("bsh,oh->bso", hidden_states, params["w_qkv"]) + params["b_qkv"]
    q, k, v = jnp.split(qkv, 3, axis=-1)

    def tr(t):  # [b, s, h] -> [b, n, s, hn]
        return t.reshape(b, s, num_heads, hn).transpose(0, 2, 1, 3)

    q, k, v = tr(q), tr(k), tr(v)
    scores = jnp.einsum("bnqd,bnkd->bnqk", q, k) / math.sqrt(hn)
    scores = scores * ltor_mask - 10000.0 * (1.0 - ltor_mask)
    probs = jax.nn.softmax(scores, axis=-1)
    ctx = jnp.einsum("bnqk,bnkd->bnqd", probs, v)
    ctx = ctx.transpose(0, 2, 1, 3).reshape(b, s, h)
    return jnp.einsum("bsh,oh->bso", ctx, params["w_dense"]) + params["b_dense"]


if __name__ == "__main__":
    batch, seq, hidden, n_heads = 2, 8, 32, 4

    key = jax.random.PRNGKey(0)
    kx, kq, kd = jax.random.split(key, 3)

    hidden_states = jax.random.normal(kx, (batch, seq, hidden), dtype=jnp.float32)

    # Deterministic "init_method"-style params (normal, std=0.02), zero biases.
    params = {
        "w_qkv": 0.02 * jax.random.normal(kq, (3 * hidden, hidden), dtype=jnp.float32),
        "b_qkv": jnp.zeros((3 * hidden,), dtype=jnp.float32),
        "w_dense": 0.02 * jax.random.normal(kd, (hidden, hidden), dtype=jnp.float32),
        "b_dense": jnp.zeros((hidden,), dtype=jnp.float32),
    }

    # Lower-triangular (left-to-right) mask, shape [1, 1, s, s], 1.0 = attend.
    ltor_mask = jnp.tril(jnp.ones((seq, seq), dtype=jnp.float32)).reshape(1, 1, seq, seq)

    kernel_params = prepare_params(params)   # one-time transpose + bf16 cast

    out = gpt2_parallel_self_attention(hidden_states, ltor_mask, kernel_params, n_heads)
    out = jax.block_until_ready(out)

    ref = _reference(hidden_states, ltor_mask, params, n_heads)
    assert out.shape == (batch, seq, hidden)
    # bf16 MXU operands + approx reciprocal -> slightly looser tolerance than pure f32.
    assert jnp.allclose(out, ref, atol=2e-2, rtol=2e-2), "mismatch vs pure-JAX reference"

    print("KERNEL_OK")
</pallas_src>

<mosaic_0001>
module attributes {stable_mosaic.version = 11 : i64} {
  func.func @_qkv_proj_kernel(%arg0: i32, %arg1: i32, %arg2: memref<1x8x32xbf16, #tpu.memory_space<vmem>>, %arg3: memref<3x32x32xbf16, #tpu.memory_space<vmem>>, %arg4: memref<3x32xf32, #tpu.memory_space<vmem>>, %arg5: memref<1x4x8x8xbf16, #tpu.memory_space<vmem>>, %arg6: memref<1x4x8x8xbf16, #tpu.memory_space<vmem>>, %arg7: memref<1x4x8x8xbf16, #tpu.memory_space<vmem>>) attributes {dimension_semantics = [#tpu.dimension_semantics<parallel>, #tpu.dimension_semantics<parallel>], iteration_bounds = array<i64: 2, 1>, scalar_prefetch = 0 : i64, scratch_operands = 0 : i64, tpu.core_type = #tpu.core_type<tc>, window_params = [{transform_indices = @transform_0, window_bounds = array<i64: 1, 8, 32>}, {pipeline_mode = #tpu.pipeline_mode<synchronous>, transform_indices = @transform_1, window_bounds = array<i64: 3, 32, 32>}, {pipeline_mode = #tpu.pipeline_mode<synchronous>, transform_indices = @transform_2, window_bounds = array<i64: 3, 32>}, {transform_indices = @transform_3, window_bounds = array<i64: 1, 4, 8, 8>}, {transform_indices = @transform_4, window_bounds = array<i64: 1, 4, 8, 8>}, {transform_indices = @transform_5, window_bounds = array<i64: 1, 4, 8, 8>}]} {
    %c0 = arith.constant 0 : index
    %c0_0 = arith.constant 0 : index
    %c0_1 = arith.constant 0 : index
    %0 = vector.load %arg2[%c0, %c0_0, %c0_1] : memref<1x8x32xbf16, #tpu.memory_space<vmem>>, vector<1x8x32xbf16>
    %1 = vector.shape_cast %0 : vector<1x8x32xbf16> to vector<8x32xbf16>
    %c0_2 = arith.constant 0 : index
    %c0_3 = arith.constant 0 : index
    %c0_4 = arith.constant 0 : index
    %2 = vector.load %arg3[%c0_2, %c0_3, %c0_4] : memref<3x32x32xbf16, #tpu.memory_space<vmem>>, vector<1x32x32xbf16>
    %3 = vector.shape_cast %2 : vector<1x32x32xbf16> to vector<32x32xbf16>
    %cst = arith.constant dense<0.000000e+00> : vector<8x32xf32>
    %4 = tpu.matmul %1, %3, %cst {dimension_numbers = #tpu.dot_dimension_numbers<[1], [0], [0], [1], [0, 0, 1, 1], [], []>} : vector<8x32xbf16>, vector<32x32xbf16>, vector<8x32xf32> -> vector<8x32xf32>
    %c0_5 = arith.constant 0 : index
    %c0_6 = arith.constant 0 : index
    %5 = vector.load %arg4[%c0_5, %c0_6] : memref<3x32xf32, #tpu.memory_space<vmem>>, vector<1x32xf32>
    %6 = vector.shape_cast %5 : vector<1x32xf32> to vector<32xf32>
    %7 = vector.shape_cast %6 : vector<32xf32> to vector<1x32xf32>
    %8 = vector.broadcast %7 : vector<1x32xf32> to vector<8x32xf32>
    %9 = arith.addf %4, %8 : vector<8x32xf32>
    %c1 = arith.constant 1 : index
    %c0_7 = arith.constant 0 : index
    %c0_8 = arith.constant 0 : index
    %10 = vector.load %arg3[%c1, %c0_7, %c0_8] : memref<3x32x32xbf16, #tpu.memory_space<vmem>>, vector<1x32x32xbf16>
    %11 = vector.shape_cast %10 : vector<1x32x32xbf16> to vector<32x32xbf16>
    %cst_9 = arith.constant dense<0.000000e+00> : vector<8x32xf32>
    %12 = tpu.matmul %1, %11, %cst_9 {dimension_numbers = #tpu.dot_dimension_numbers<[1], [0], [0], [1], [0, 0, 1, 1], [], []>} : vector<8x32xbf16>, vector<32x32xbf16>, vector<8x32xf32> -> vector<8x32xf32>
    %c1_10 = arith.constant 1 : index
    %c0_11 = arith.constant 0 : index
    %13 = vector.load %arg4[%c1_10, %c0_11] : memref<3x32xf32, #tpu.memory_space<vmem>>, vector<1x32xf32>
    %14 = vector.shape_cast %13 : vector<1x32xf32> to vector<32xf32>
    %15 = vector.shape_cast %14 : vector<32xf32> to vector<1x32xf32>
    %16 = vector.broadcast %15 : vector<1x32xf32> to vector<8x32xf32>
    %17 = arith.addf %12, %16 : vector<8x32xf32>
    %c2 = arith.constant 2 : index
    %c0_12 = arith.constant 0 : index
    %c0_13 = arith.constant 0 : index
    %18 = vector.load %arg3[%c2, %c0_12, %c0_13] : memref<3x32x32xbf16, #tpu.memory_space<vmem>>, vector<1x32x32xbf16>
    %19 = vector.shape_cast %18 : vector<1x32x32xbf16> to vector<32x32xbf16>
    %cst_14 = arith.constant dense<0.000000e+00> : vector<8x32xf32>
    %20 = tpu.matmul %1, %19, %cst_14 {dimension_numbers = #tpu.dot_dimension_numbers<[1], [0], [0], [1], [0, 0, 1, 1], [], []>} : vector<8x32xbf16>, vector<32x32xbf16>, vector<8x32xf32> -> vector<8x32xf32>
    %c2_15 = arith.constant 2 : index
    %c0_16 = arith.constant 0 : index
    %21 = vector.load %arg4[%c2_15, %c0_16] : memref<3x32xf32, #tpu.memory_space<vmem>>, vector<1x32xf32>
    %22 = vector.shape_cast %21 : vector<1x32xf32> to vector<32xf32>
    %23 = vector.shape_cast %22 : vector<32xf32> to vector<1x32xf32>
    %24 = vector.broadcast %23 : vector<1x32xf32> to vector<8x32xf32>
    %25 = arith.addf %20, %24 : vector<8x32xf32>
    %cst_17 = arith.constant 0.353553385 : f32
    %26 = vector.broadcast %cst_17 : f32 to vector<8x32xf32>
    %27 = arith.mulf %9, %26 : vector<8x32xf32>
    %28 = vector.shape_cast %27 : vector<8x32xf32> to vector<8x4x8xf32>
    %29 = tpu.transpose %28, [1, 0, 2] : vector<8x4x8xf32> -> vector<4x8x8xf32>
    %30 = arith.truncf %29 : vector<4x8x8xf32> to vector<4x8x8xbf16>
    %c0_18 = arith.constant 0 : index
    %c0_19 = arith.constant 0 : index
    %c0_20 = arith.constant 0 : index
    %c0_21 = arith.constant 0 : index
    %31 = vector.load %arg5[%c0_18, %c0_19, %c0_20, %c0_21] : memref<1x4x8x8xbf16, #tpu.memory_space<vmem>>, vector<1x4x8x8xbf16>
    %32 = vector.shape_cast %31 : vector<1x4x8x8xbf16> to vector<4x8x8xbf16>
    %33 = vector.shape_cast %30 : vector<4x8x8xbf16> to vector<1x4x8x8xbf16>
    tpu.vector_store %arg5[%c0_18, %c0_19, %c0_20, %c0_21], %33 {strides = array<i32>} : memref<1x4x8x8xbf16, #tpu.memory_space<vmem>>, vector<1x4x8x8xbf16>,
    %34 = vector.shape_cast %17 : vector<8x32xf32> to vector<8x4x8xf32>
    %35 = tpu.transpose %34, [1, 0, 2] : vector<8x4x8xf32> -> vector<4x8x8xf32>
    %36 = arith.truncf %35 : vector<4x8x8xf32> to vector<4x8x8xbf16>
    %c0_22 = arith.constant 0 : index
    %c0_23 = arith.constant 0 : index
    %c0_24 = arith.constant 0 : index
    %c0_25 = arith.constant 0 : index
    %37 = vector.load %arg6[%c0_22, %c0_23, %c0_24, %c0_25] : memref<1x4x8x8xbf16, #tpu.memory_space<vmem>>, vector<1x4x8x8xbf16>
    %38 = vector.shape_cast %37 : vector<1x4x8x8xbf16> to vector<4x8x8xbf16>
    %39 = vector.shape_cast %36 : vector<4x8x8xbf16> to vector<1x4x8x8xbf16>
    tpu.vector_store %arg6[%c0_22, %c0_23, %c0_24, %c0_25], %39 {strides = array<i32>} : memref<1x4x8x8xbf16, #tpu.memory_space<vmem>>, vector<1x4x8x8xbf16>,
    %40 = vector.shape_cast %25 : vector<8x32xf32> to vector<8x4x8xf32>
    %41 = tpu.transpose %40, [1, 0, 2] : vector<8x4x8xf32> -> vector<4x8x8xf32>
    %42 = arith.truncf %41 : vector<4x8x8xf32> to vector<4x8x8xbf16>
    %c0_26 = arith.constant 0 : index
    %c0_27 = arith.constant 0 : index
    %c0_28 = arith.constant 0 : index
    %c0_29 = arith.constant 0 : index
    %43 = vector.load %arg7[%c0_26, %c0_27, %c0_28, %c0_29] : memref<1x4x8x8xbf16, #tpu.memory_space<vmem>>, vector<1x4x8x8xbf16>
    %44 = vector.shape_cast %43 : vector<1x4x8x8xbf16> to vector<4x8x8xbf16>
    %45 = vector.shape_cast %42 : vector<4x8x8xbf16> to vector<1x4x8x8xbf16>
    tpu.vector_store %arg7[%c0_26, %c0_27, %c0_28, %c0_29], %45 {strides = array<i32>} : memref<1x4x8x8xbf16, #tpu.memory_space<vmem>>, vector<1x4x8x8xbf16>,
    return
  }
  func.func @transform_0(%arg0: i32, %arg1: i32) -> (i32, i32, i32) {
    %c0_i32 = arith.constant 0 : i32
    %c0_i32_0 = arith.constant 0 : i32
    return %arg0, %arg1, %c0_i32 : i32, i32, i32
  }
  func.func @transform_1(%arg0: i32, %arg1: i32) -> (i32, i32, i32) {
    %c0_i32 = arith.constant 0 : i32
    %c0_i32_0 = arith.constant 0 : i32
    %c0_i32_1 = arith.constant 0 : i32
    %c0_i32_2 = arith.constant 0 : i32
    return %c0_i32, %c0_i32_0, %c0_i32_1 : i32, i32, i32
  }
  func.func @transform_2(%arg0: i32, %arg1: i32) -> (i32, i32) {
    %c0_i32 = arith.constant 0 : i32
    %c0_i32_0 = arith.constant 0 : i32
    %c0_i32_1 = arith.constant 0 : i32
    return %c0_i32, %c0_i32_0 : i32, i32
  }
  func.func @transform_3(%arg0: i32, %arg1: i32) -> (i32, i32, i32, i32) {
    %c0_i32 = arith.constant 0 : i32
    %c0_i32_0 = arith.constant 0 : i32
    %c0_i32_1 = arith.constant 0 : i32
    return %arg0, %c0_i32, %arg1, %c0_i32_0 : i32, i32, i32, i32
  }
  func.func @transform_4(%arg0: i32, %arg1: i32) -> (i32, i32, i32, i32) {
    %c0_i32 = arith.constant 0 : i32
    %c0_i32_0 = arith.constant 0 : i32
    %c0_i32_1 = arith.constant 0 : i32
    return %arg0, %c0_i32, %arg1, %c0_i32_0 : i32, i32, i32, i32
  }
  func.func @transform_5(%arg0: i32, %arg1: i32) -> (i32, i32, i32, i32) {
    %c0_i32 = arith.constant 0 : i32
    %c0_i32_0 = arith.constant 0 : i32
    %c0_i32_1 = arith.constant 0 : i32
    return %arg0, %c0_i32, %arg1, %c0_i32_0 : i32, i32, i32, i32
  }
}

</mosaic_0001>

<llo_original>
// kernel: tpu_custom_call.1
$region0: #{tpu_custom_call.1}
  #allocation0 [shape = 'u32[]', space=smem, size = 0x4, offset = 0x4, fixed_abs, tag = 'smem constant byte address 0x4 - core index']
  #allocation1 [shape = 'u32[144,128]{1,0:T(1,128)}', space=vmem, size = 0x12000, scoped, tag = 'internal scratch']
  %s0 = inlined_call_operand.hbm [shape: bf16[2,8,32], index: 0, kind: input, shape index: {}]
  %s1 = inlined_call_operand.hbm [shape: bf16[3,32,32], index: 1, kind: input, shape index: {}]
  %s2 = inlined_call_operand.vmem [shape: f32[3,32], index: 2, kind: input, shape index: {}]
  %s3 = inlined_call_operand.hbm [shape: bf16[2,4,8,8], index: 3, kind: output, shape index: {0}]
  %s4 = inlined_call_operand.hbm [shape: bf16[2,4,8,8], index: 4, kind: output, shape index: {1}]
  %s5 = inlined_call_operand.hbm [shape: bf16[2,4,8,8], index: 5, kind: output, shape index: {2}]
  %6 = xla_tuple %s3, %s4, %s5
  %s7 = sld [smem:[#allocation0]]
  $region69: #{tpu_custom_call.1} parent=0
    _
  %s9 = ssub.s32 1, %s7
  %s10 = scalar_select 0, %s9, %s7
  $region1: #{tpu_custom_call.1} parent=0
    #allocation2 [shape = 'u8[4096]{0}', space=vmem, size = 0x1000, scoped, tag = 'input window, operand 0']
    #allocation3 [shape = 's32[2]{0}', space=sflag, size = 0x8, scoped, tag = 'scoped memory for tpu_custom_call.1']
    #allocation4 [shape = 's32[2]{0}', space=sflag, size = 0x8, scoped, tag = 'scoped memory for tpu_custom_call.1']
    #allocation5 [shape = 'u8[24576]{0}', space=vmem, size = 0x6000, scoped, tag = 'input window, operand 1, single buffered']
    #allocation6 [shape = 's32[1]{0}', space=sflag, size = 0x4, scoped, tag = 'scoped memory for tpu_custom_call.1']
    #allocation7 [shape = 'u8[16384]{0}', space=vmem, size = 0x4000, scoped, tag = 'output window, operand 0']
    #allocation8 [shape = 'u8[16384]{0}', space=vmem, size = 0x4000, scoped, tag = 'output window, operand 1']
    #allocation9 [shape = 's32[2]{0}', space=sflag, size = 0x8, scoped, tag = 'scoped memory for tpu_custom_call.1']
    #allocation10 [shape = 'u8[16384]{0}', space=vmem, size = 0x4000, scoped, tag = 'output window, operand 2']
    %11 = vsyncpa [#allocation3], 0
    %s12 = scalar_lea.sflag [#allocation3], 1
    %13 = vsyncpa %s12, 0
    %14 = vsyncpa [#allocation6], 0
    %15 = vsyncpa [#allocation4], 0
    %s16 = scalar_lea.sflag [#allocation4], 1
    %17 = vsyncpa %s16, 0
    %18 = vsyncpa [#allocation9], 0
    %s19 = scalar_lea.sflag [#allocation9], 1
    %20 = vsyncpa %s19, 0
    loop: start=0, step=1, limit=4
    $region2: #{tpu_custom_call.1} parent=1 // loop_pre_header
      _
    $region3: #{tpu_custom_call.1} parent=1 // loop_header
      %s22 = sphi 0, %s26
      %p23 = scmp.ge.s32.totalorder %s22, 4
      %s29 = sphi 0, %s41
      %s30 = sphi 0, %s37
      %s31 = sphi 0, %s29
      %s32 = sphi 0, %s30
      %s33 = sphi 0, %s31
      %s34 = sphi 0, %s32
      %s46 = sphi 0, %s48
      %s49 = sphi 0, %s46
      %s50 = sphi 0, %s49
      %s66 = sphi 0, %s50
      %s70 = sphi 0, %s70
      %s72 = sphi 0, %s70
      %s73 = sphi 0, %s72
      %s87 = sphi 0, %s73
      %s91 = sphi 0, %s91
      %s93 = sphi 0, %s91
      %s94 = sphi 0, %s93
      %s108 = sphi 0, %s94
      %s116 = sphi 0, %s118
      %s119 = sphi 0, %s116
      %s120 = sphi 0, %s119
      %s136 = sphi 0, %s120
      %s144 = sphi 0, %s146
      %s147 = sphi 0, %s144
      %s148 = sphi 0, %s147
      %s164 = sphi 0, %s148
      %s172 = sphi 0, %s174
      %s175 = sphi 0, %s172
      %s176 = sphi 0, %s175
      %s192 = sphi 0, %s176
    $region4: #{tpu_custom_call.1} parent=1 // loop_header_branch
      %25 = sbr.rel (%p23) target = $region8
    $region5: #{tpu_custom_call.1} parent=1 // loop_body
      %s27 = ssub.s32 %s22, 1
      %s28 = ssub.s32 %s22, 2
      %s35 = sadd.s32 1, %s30
      %p36 = scmp.ge.s32.totalorder %s35, 1
      %s37 = scalar_select %p36, 0, %s35
      %s38 = sadd.s32 1, %s29
      %s39 = scalar_select %p36, %s38, %s29
      %p40 = scmp.ge.s32.totalorder %s39, 2
      %s41 = scalar_select %p40, 0, %s39
      %s42 = ssub.s32 %s29, %s41
      %s43 = ssub.s32 %s30, %s37
      %s44 = sor.u32 %s42, %s43
      %p45 = scmp.eq.s32.totalorder %s44, 0
      %s47 = sadd.s32 %s46, 1
      %s48 = scalar_select %p45, %s46, %s47
      %p51 = pneg %p45
      %p52 = scmp.eq.s32.totalorder %s22, 1
      %p53 = por %p51, %p52
      %p54 = scmp.ne.s32.totalorder %s46, %s49
      %p55 = scmp.eq.s32.totalorder %s22, 0
      %p56 = por %p54, %p55
      %p57 = scmp.ne.s32.totalorder %s46, %s49
      %p58 = scmp.eq.s32.totalorder %s27, 1
      %p59 = por %p57, %p58
      %p60 = scmp.ne.s32.totalorder %s49, %s50
      %p61 = scmp.eq.s32.totalorder %s27, 0
      %p62 = por %p60, %p61
      %p63 = scmp.ne.s32.totalorder %s49, %s50
      %p64 = scmp.eq.s32.totalorder %s28, 1
      %p65 = por %p63, %p64
      %p67 = scmp.ne.s32.totalorder %s50, %s66
      %p68 = scmp.eq.s32.totalorder %s28, 0
      %p69 = por %p67, %p68
      %s71 = sadd.s32 %s70, 1
      %p74 = scmp.eq.s32.totalorder %s22, 1
      %p75 = scmp.ne.s32.totalorder %s70, %s72
      %p76 = scmp.eq.s32.totalorder %s22, 0
      %p77 = por %p75, %p76
      %p78 = scmp.ne.s32.totalorder %s70, %s72
      %p79 = scmp.eq.s32.totalorder %s27, 1
      %p80 = por %p78, %p79
      %p81 = scmp.ne.s32.totalorder %s72, %s73
      %p82 = scmp.eq.s32.totalorder %s27, 0
      %p83 = por %p81, %p82
      %p84 = scmp.ne.s32.totalorder %s72, %s73
      %p85 = scmp.eq.s32.totalorder %s28, 1
      %p86 = por %p84, %p85
      %p88 = scmp.ne.s32.totalorder %s73, %s87
      %p89 = scmp.eq.s32.totalorder %s28, 0
      %p90 = por %p88, %p89
      %s92 = sadd.s32 %s91, 1
      %p95 = scmp.eq.s32.totalorder %s22, 1
      %p96 = scmp.ne.s32.totalorder %s91, %s93
      %p97 = scmp.eq.s32.totalorder %s22, 0
      %p98 = por %p96, %p97
      %p99 = scmp.ne.s32.totalorder %s91, %s93
      %p100 = scmp.eq.s32.totalorder %s27, 1
      %p101 = por %p99, %p100
      %p102 = scmp.ne.s32.totalorder %s93, %s94
      %p103 = scmp.eq.s32.totalorder %s27, 0
      %p104 = por %p102, %p103
      %p105 = scmp.ne.s32.totalorder %s93, %s94
      %p106 = scmp.eq.s32.totalorder %s28, 1
      %p107 = por %p105, %p106
      %p109 = scmp.ne.s32.totalorder %s94, %s108
      %p110 = scmp.eq.s32.totalorder %s28, 0
      %p111 = por %p109, %p110
      %s112 = ssub.s32 %s29, %s41
      %s113 = ssub.s32 %s30, %s37
      %s114 = sor.u32 %s112, %s113
      %p115 = scmp.eq.s32.totalorder %s114, 0
      %s117 = sadd.s32 %s116, 1
      %s118 = scalar_select %p115, %s116, %s117
      %p121 = pneg %p115
      %p122 = scmp.eq.s32.totalorder %s22, 1
      %p123 = por %p121, %p122
      %p124 = scmp.ne.s32.totalorder %s116, %s119
      %p125 = scmp.eq.s32.totalorder %s22, 0
      %p126 = por %p124, %p125
      %p127 = scmp.ne.s32.totalorder %s116, %s119
      %p128 = scmp.eq.s32.totalorder %s27, 1
      %p129 = por %p127, %p128
      %p130 = scmp.ne.s32.totalorder %s119, %s120
      %p131 = scmp.eq.s32.totalorder %s27, 0
      %p132 = por %p130, %p131
      %p133 = scmp.ne.s32.totalorder %s119, %s120
      %p134 = scmp.eq.s32.totalorder %s28, 1
      %p135 = por %p133, %p134
      %p137 = scmp.ne.s32.totalorder %s120, %s136
      %p138 = scmp.eq.s32.totalorder %s28, 0
      %p139 = por %p137, %p138
      %s140 = ssub.s32 %s29, %s41
      %s141 = ssub.s32 %s30, %s37
      %s142 = sor.u32 %s140, %s141
      %p143 = scmp.eq.s32.totalorder %s142, 0
      %s145 = sadd.s32 %s144, 1
      %s146 = scalar_select %p143, %s144, %s145
      %p149 = pneg %p143
      %p150 = scmp.eq.s32.totalorder %s22, 1
      %p151 = por %p149, %p150
      %p152 = scmp.ne.s32.totalorder %s144, %s147
      %p153 = scmp.eq.s32.totalorder %s22, 0
      %p154 = por %p152, %p153
      %p155 = scmp.ne.s32.totalorder %s144, %s147
      %p156 = scmp.eq.s32.totalorder %s27, 1
      %p157 = por %p155, %p156
      %p158 = scmp.ne.s32.totalorder %s147, %s148
      %p159 = scmp.eq.s32.totalorder %s27, 0
      %p160 = por %p158, %p159
      %p161 = scmp.ne.s32.totalorder %s147, %s148
      %p162 = scmp.eq.s32.totalorder %s28, 1
      %p163 = por %p161, %p162
      %p165 = scmp.ne.s32.totalorder %s148, %s164
      %p166 = scmp.eq.s32.totalorder %s28, 0
      %p167 = por %p165, %p166
      %s168 = ssub.s32 %s29, %s41
      %s169 = ssub.s32 %s30, %s37
      %s170 = sor.u32 %s168, %s169
      %p171 = scmp.eq.s32.totalorder %s170, 0
      %s173 = sadd.s32 %s172, 1
      %s174 = scalar_select %p171, %s172, %s173
      %p177 = pneg %p171
      %p178 = scmp.eq.s32.totalorder %s22, 1
      %p179 = por %p177, %p178
      %p180 = scmp.ne.s32.totalorder %s172, %s175
      %p181 = scmp.eq.s32.totalorder %s22, 0
      %p182 = por %p180, %p181
      %p183 = scmp.ne.s32.totalorder %s172, %s175
      %p184 = scmp.eq.s32.totalorder %s27, 1
      %p185 = por %p183, %p184
      %p186 = scmp.ne.s32.totalorder %s175, %s176
      %p187 = scmp.eq.s32.totalorder %s27, 0
      %p188 = por %p186, %p187
      %p189 = scmp.ne.s32.totalorder %s175, %s176
      %p190 = scmp.eq.s32.totalorder %s28, 1
      %p191 = por %p189, %p190
      %p193 = scmp.ne.s32.totalorder %s176, %s192
      %p194 = scmp.eq.s32.totalorder %s28, 0
      %p195 = por %p193, %p194
      %p196 = scmp.le.s32.totalorder 1, %s22
      %p197 = scmp.lt.s32.totalorder %s22, 3
      %p198 = pnand %p196, %p197
      %p199 = pneg %p198
      // Predicated region
      $region9: #{tpu_custom_call.1} parent=5 // pred_check
        _
      $region10: #{tpu_custom_call.1} parent=5 // pred_check_branch
        %201 = sbr.rel (%p198) target = $region12
      $region11: #{tpu_custom_call.1} parent=5 // pred_region
        %s202 = ssub.s32 %s22, 1
        // Predicated region
        $region13: #{tpu_custom_call.1} parent=11 // pred_check
          %p203 = pneg %p83
        $region14: #{tpu_custom_call.1} parent=11 // pred_check_branch
          %205 = sbr.rel (%p203) target = $region16
        $region15: #{tpu_custom_call.1} parent=11 // pred_region
          %s207 = ssub.s32 768, 768
          %208 = vsyncadd [#allocation6], %s207
          %s209 = sshll.u32 [#allocation5], 4
          %s210 = int_to_ptr.vmem [resolvable:$true] %s209
          %215 = dma.hbm_to_vmem [thread:$0]  %s1, 768, %s210, [#allocation6], 64, 64, 4
        $region16: #{tpu_custom_call.1} parent=11 // pred_fallthru
          _
        // Predicated region
        $region17: #{tpu_custom_call.1} parent=11 // pred_check
          %p216 = pneg %p104
        $region18: #{tpu_custom_call.1} parent=11 // pred_check_branch
          %218 = sbr.rel (%p216) target = $region20
        $region19: #{tpu_custom_call.1} parent=11 // pred_region
          _
        $region20: #{tpu_custom_call.1} parent=11 // pred_fallthru
          _
      $region12: #{tpu_custom_call.1} parent=5 // pred_fallthru
        _
      %p219 = scmp.lt.s32.totalorder %s22, 2
      // Predicated region
      $region21: #{tpu_custom_call.1} parent=5 // pred_check
        %p220 = pneg %p219
      $region22: #{tpu_custom_call.1} parent=5 // pred_check_branch
        %222 = sbr.rel (%p220) target = $region24
      $region23: #{tpu_custom_call.1} parent=5 // pred_region
        // Predicated region
        $region25: #{tpu_custom_call.1} parent=23 // pred_check
          %p223 = pneg %p56
        $region26: #{tpu_custom_call.1} parent=23 // pred_check_branch
          %225 = sbr.rel (%p223) target = $region28
        $region27: #{tpu_custom_call.1} parent=23 // pred_region
          %s226 = sand.u32 %s46, 1
          %s227 = scalar_lea.sflag [#allocation3], %s226
          %s228 = sand.u32 %s46, 1
          %s229 = smul.addr %s228, 4
          %s230 = scalar_lea.vmem [#allocation2], %s229
          %s232 = ssub.s32 64, 64
          %233 = vsyncadd %s227, %s232
          %s234 = sadd.s32 %s30, %s29
          %s235 = smul.addr %s234, 64
          %s236 = scalar_lea.hbm %s0, %s235
          %s238 = sshll.u32 %s230, 4
          %s239 = int_to_ptr.vmem [resolvable:$true] %s238
          %241 = dma.hbm_to_vmem [thread:$0]  %s236, 64, %s239, %s227
        $region28: #{tpu_custom_call.1} parent=23 // pred_fallthru
          _
      $region24: #{tpu_custom_call.1} parent=5 // pred_fallthru
        _
      %p242 = scmp.le.s32.totalorder 1, %s22
      %p243 = scmp.lt.s32.totalorder %s22, 3
      %p244 = pnand %p242, %p243
      %p245 = pneg %p244
      // Predicated region
      $region29: #{tpu_custom_call.1} parent=5 // pred_check
        _
      $region30: #{tpu_custom_call.1} parent=5 // pred_check_branch
        %247 = sbr.rel (%p244) target = $region32
      $region31: #{tpu_custom_call.1} parent=5 // pred_region
        %s248 = ssub.s32 %s22, 1
        %s249 = sand.u32 %s49, 1
        %s250 = scalar_lea.sflag [#allocation3], %s249
        %s251 = sand.u32 %s49, 1
        %s252 = smul.addr %s251, 4
        %s253 = scalar_lea.vmem [#allocation2], %s252
        // Predicated region
        $region33: #{tpu_custom_call.1} parent=31 // pred_check
          %p254 = pneg %p62
        $region34: #{tpu_custom_call.1} parent=31 // pred_check_branch
          %256 = sbr.rel (%p254) target = $region36
        $region35: #{tpu_custom_call.1} parent=31 // pred_region
          %257 = dma.done %s250, 64
        $region36: #{tpu_custom_call.1} parent=31 // pred_fallthru
          _
        // Predicated region
        $region37: #{tpu_custom_call.1} parent=31 // pred_check
          %p258 = pneg %p83
        $region38: #{tpu_custom_call.1} parent=31 // pred_check_branch
          %260 = sbr.rel (%p258) target = $region40
        $region39: #{tpu_custom_call.1} parent=31 // pred_region
          %261 = dma.done [#allocation6], 768
        $region40: #{tpu_custom_call.1} parent=31 // pred_fallthru
          _
        %s262 = sand.u32 %s49, 1
        %s263 = scalar_lea.sflag [#allocation3], %s262
        %s264 = sand.u32 %s49, 1
        %s265 = smul.addr %s264, 4
        %s266 = scalar_lea.vmem [#allocation2], %s265
        %p267 = pneg %p62
        %p268 = pneg %p59
        %p269 = pneg %p83
        %p270 = pneg %p80
        %p271 = pneg %p104
        %p272 = pneg %p101
        %p273 = pneg %p132
        %p274 = pneg %p129
        %s275 = sand.u32 %s119, 1
        %s276 = scalar_lea.sflag [#allocation4], %s275
        %s277 = sand.u32 %s119, 1
        %s278 = smul.addr %s277, 16
        %s279 = scalar_lea.vmem [#allocation7], %s278
        %p280 = pneg %p160
        %p281 = pneg %p157
        %s282 = sand.u32 %s27, 1
        %s283 = scalar_lea.sflag [#allocation9], %s282
        %s284 = sand.u32 %s147, 1
        %s285 = smul.addr %s284, 16
        %s286 = scalar_lea.vmem [#allocation8], %s285
        %p287 = pneg %p188
        %p288 = pneg %p185
        %s289 = sand.u32 %s27, 1
        %s290 = scalar_lea.sflag [#allocation9], %s289
        %s291 = sand.u32 %s175, 1
        %s292 = smul.addr %s291, 16
        %s293 = scalar_lea.vmem [#allocation10], %s292
        %v295 = vld [vmem:[%s253] sm:$0xf]
        %v296 = vld [vmem:[#allocation5] sm:$0xf]
        %v297 = vld [vmem:[#allocation5 + $0x4] sm:$0xf]
        %v298 = vld [vmem:[#allocation5 + $0x8] sm:$0xf]
        %v299 = vld [vmem:[#allocation5 + $0xc] sm:$0xf]
        %v300 = vld [vmem:[%s2] sm:$0x1]
        %v301 = vlaneseq
        %v302 = vshrl.u32 %v301, 7
        %v303 = vsub.s32 0, %v302
        %v304 = vrot.slane %v300, %v303
        %v309 = vunpack.c.l.b16 %v296
        %v310 = vunpack.c.l.b16 %v297
        %v311 = vunpack.c.l.b16 %v298
        %v312 = vunpack.c.l.b16 %v299
        %v313 = vpack.c.b16 %v310, %v309
        %v314 = vpack.c.b16 %v312, %v311
        %vm317 = vcmask 261120
        %v319 = vsel %vm317, %v295, 0
        %321 = vmatprep.subr.bf16.mxu0 0
        %322 = vmatpush1.bf16.msra.mxu0 %v313
        %323 = vmatprep.subr.bf16.mxu0 0
        %324 = vmatpush1.bf16.msra.mxu0 %v314
        %325 = vmatprep.subr.bf16.mxu0 0
        %326 = vmatpush1.bf16.msra.mxu0 0
        %327 = vmatprep.subr.bf16.mxu0 0
        %328 = vmatpush1.bf16.msra.mxu0 0
        %329 = vmatprep.subr.bf16.mxu0 0
        %330 = vmatpush1.bf16.msra.mxu0 0
        %331 = vmatprep.subr.bf16.mxu0 0
        %332 = vmatpush1.bf16.msra.mxu0 0
        %333 = vmatprep.subr.bf16.mxu0 0
        %334 = vmatpush1.bf16.msra.mxu0 0
        %335 = vmatprep.subr.bf16.mxu0 0
        %336 = vmatpush1.bf16.msra.mxu0 0
        %337 = vmatprep.subr.bf16.mxu0 0
        %338 = vmatpush1.bf16.msra.mxu0 0
        %339 = vmatprep.subr.bf16.mxu0 0
        %340 = vmatpush1.bf16.msra.mxu0 0
        %341 = vmatprep.subr.bf16.mxu0 0
        %342 = vmatpush1.bf16.msra.mxu0 0
        %343 = vmatprep.subr.bf16.mxu0 0
        %344 = vmatpush1.bf16.msra.mxu0 0
        %345 = vmatprep.subr.bf16.mxu0 0
        %346 = vmatpush1.bf16.msra.mxu0 0
        %347 = vmatprep.subr.bf16.mxu0 0
        %348 = vmatpush1.bf16.msra.mxu0 0
        %349 = vmatprep.subr.bf16.mxu0 0
        %350 = vmatpush1.bf16.msra.mxu0 0
        %351 = vmatprep.subr.bf16.mxu0 0
        %352 = vmatpush1.bf16.msra.mxu0 0
        %353 = vmatprep.mubr.bf16.mxu0 0
        %354 = vmatmul.mubr.bf16.gmra.mrb[0].mxu0 %v319
        %v355 = vpop.f32.mrb[0].mxu0
        %v356 = vadd.f32 %v304, %v355
        %v357 = vpop.f32.mrb[0].mxu0
        %v358 = vpop.f32.mrb[0].mxu0
        %v359 = vpop.f32.mrb[0].mxu0
        %360 = vdwg.mxu0
        %s361 = scalar_lea.vmem [#allocation5], 16
        %v362 = vld [vmem:[%s361] sm:$0xf]
        %v363 = vld [vmem:[%s361 + $0x4] sm:$0xf]
        %v364 = vld [vmem:[%s361 + $0x8] sm:$0xf]
        %v365 = vld [vmem:[%s361 + $0xc] sm:$0xf]
        %v366 = vld [vmem:[%s2 + $0x1] sm:$0x1]
        %v367 = vlaneseq
        %v368 = vshrl.u32 %v367, 7
        %v369 = vsub.s32 0, %v368
        %v370 = vrot.slane %v366, %v369
        %v375 = vunpack.c.l.b16 %v362
        %v376 = vunpack.c.l.b16 %v363
        %v377 = vunpack.c.l.b16 %v364
        %v378 = vunpack.c.l.b16 %v365
        %v379 = vpack.c.b16 %v376, %v375
        %v380 = vpack.c.b16 %v378, %v377
        %383 = vmatprep.subr.bf16.mxu0 0
        %384 = vmatpush1.bf16.msra.mxu0 %v379
        %385 = vmatprep.subr.bf16.mxu0 0
        %386 = vmatpush1.bf16.msra.mxu0 %v380
        %387 = vmatprep.subr.bf16.mxu0 0
        %388 = vmatpush1.bf16.msra.mxu0 0
        %389 = vmatprep.subr.bf16.mxu0 0
        %390 = vmatpush1.bf16.msra.mxu0 0
        %391 = vmatprep.subr.bf16.mxu0 0
        %392 = vmatpush1.bf16.msra.mxu0 0
        %393 = vmatprep.subr.bf16.mxu0 0
        %394 = vmatpush1.bf16.msra.mxu0 0
        %395 = vmatprep.subr.bf16.mxu0 0
        %396 = vmatpush1.bf16.msra.mxu0 0
        %397 = vmatprep.subr.bf16.mxu0 0
        %398 = vmatpush1.bf16.msra.mxu0 0
        %399 = vmatprep.subr.bf16.mxu0 0
        %400 = vmatpush1.bf16.msra.mxu0 0
        %401 = vmatprep.subr.bf16.mxu0 0
        %402 = vmatpush1.bf16.msra.mxu0 0
        %403 = vmatprep.subr.bf16.mxu0 0
        %404 = vmatpush1.bf16.msra.mxu0 0
        %405 = vmatprep.subr.bf16.mxu0 0
        %406 = vmatpush1.bf16.msra.mxu0 0
        %407 = vmatprep.subr.bf16.mxu0 0
        %408 = vmatpush1.bf16.msra.mxu0 0
        %409 = vmatprep.subr.bf16.mxu0 0
        %410 = vmatpush1.bf16.msra.mxu0 0
        %411 = vmatprep.subr.bf16.mxu0 0
        %412 = vmatpush1.bf16.msra.mxu0 0
        %413 = vmatprep.subr.bf16.mxu0 0
        %414 = vmatpush1.bf16.msra.mxu0 0
        %415 = vmatprep.mubr.bf16.mxu0 0
        %416 = vmatmul.mubr.bf16.gmra.mrb[0].mxu0 %v319
        %v417 = vpop.f32.mrb[0].mxu0
        %v418 = vadd.f32 %v370, %v417
        %v419 = vpop.f32.mrb[0].mxu0
        %v420 = vpop.f32.mrb[0].mxu0
        %v421 = vpop.f32.mrb[0].mxu0
        %422 = vdwg.mxu0
        %s423 = scalar_lea.vmem [#allocation5], 32
        %v424 = vld [vmem:[%s423] sm:$0xf]
        %v425 = vld [vmem:[%s423 + $0x4] sm:$0xf]
        %v426 = vld [vmem:[%s423 + $0x8] sm:$0xf]
        %v427 = vld [vmem:[%s423 + $0xc] sm:$0xf]
        %v428 = vld [vmem:[%s2 + $0x2] sm:$0x1]
        %v429 = vlaneseq
        %v430 = vshrl.u32 %v429, 7
        %v431 = vsub.s32 0, %v430
        %v432 = vrot.slane %v428, %v431
        %v437 = vunpack.c.l.b16 %v424
        %v438 = vunpack.c.l.b16 %v425
        %v439 = vunpack.c.l.b16 %v426
        %v440 = vunpack.c.l.b16 %v427
        %v441 = vpack.c.b16 %v438, %v437
        %v442 = vpack.c.b16 %v440, %v439
        %445 = vmatprep.subr.bf16.mxu0 0
        %446 = vmatpush1.bf16.msra.mxu0 %v441
        %447 = vmatprep.subr.bf16.mxu0 0
        %448 = vmatpush1.bf16.msra.mxu0 %v442
        %449 = vmatprep.subr.bf16.mxu0 0
        %450 = vmatpush1.bf16.msra.mxu0 0
        %451 = vmatprep.subr.bf16.mxu0 0
        %452 = vmatpush1.bf16.msra.mxu0 0
        %453 = vmatprep.subr.bf16.mxu0 0
        %454 = vmatpush1.bf16.msra.mxu0 0
        %455 = vmatprep.subr.bf16.mxu0 0
        %456 = vmatpush1.bf16.msra.mxu0 0
        %457 = vmatprep.subr.bf16.mxu0 0
        %458 = vmatpush1.bf16.msra.mxu0 0
        %459 = vmatprep.subr.bf16.mxu0 0
        %460 = vmatpush1.bf16.msra.mxu0 0
        %461 = vmatprep.subr.bf16.mxu0 0
        %462 = vmatpush1.bf16.msra.mxu0 0
        %463 = vmatprep.subr.bf16.mxu0 0
        %464 = vmatpush1.bf16.msra.mxu0 0
        %465 = vmatprep.subr.bf16.mxu0 0
        %466 = vmatpush1.bf16.msra.mxu0 0
        %467 = vmatprep.subr.bf16.mxu0 0
        %468 = vmatpush1.bf16.msra.mxu0 0
        %469 = vmatprep.subr.bf16.mxu0 0
        %470 = vmatpush1.bf16.msra.mxu0 0
        %471 = vmatprep.subr.bf16.mxu0 0
        %472 = vmatpush1.bf16.msra.mxu0 0
        %473 = vmatprep.subr.bf16.mxu0 0
        %474 = vmatpush1.bf16.msra.mxu0 0
        %475 = vmatprep.subr.bf16.mxu0 0
        %476 = vmatpush1.bf16.msra.mxu0 0
        %477 = vmatprep.mubr.bf16.mxu0 0
        %478 = vmatmul.mubr.bf16.gmra.mrb[0].mxu0 %v319
        %v479 = vpop.f32.mrb[0].mxu0
        %v480 = vadd.f32 %v432, %v479
        %v481 = vpop.f32.mrb[0].mxu0
        %v482 = vpop.f32.mrb[0].mxu0
        %v483 = vpop.f32.mrb[0].mxu0
        %484 = vdwg.mxu0
        %v485 = vmul.f32 %v356, 0.35355338
        %487 = vrot.lane.b32.xlu0 %v485, 120
        %v488 = vpop.permute.xlu0 %487
        %490 = vrot.lane.b32.xlu0 %v485, 112
        %v491 = vpop.permute.xlu0 %490
        %493 = vrot.lane.b32.xlu0 %v485, 104
        %v494 = vpop.permute.xlu0 %493
        %v496 = vcombine.low %v485, %v491
        %v497 = vcombine.high %v485, %v491
        %v499 = vunpack.c.l.s4 1983009808
        %v500 = vunpack.c.0.s8 %v499
        %v501 = vlaneseq
        %v502 = vshrl.u32 %v501, 7
        %v503 = vsub.s32 %v500, %v502
        %v504 = vrot.slane %v496, %v503
        %v506 = vunpack.c.l.s4 1983009808
        %v507 = vunpack.c.0.s8 %v506
        %v508 = vlaneseq
        %v509 = vshrl.u32 %v508, 7
        %v510 = vsub.s32 %v507, %v509
        %v511 = vrot.slane %v497, %v510
        %v512 = vcombine.low %v488, %v494
        %v513 = vcombine.high %v488, %v494
        %v515 = vunpack.c.l.s4 1983009808
        %v516 = vunpack.c.0.s8 %v515
        %v517 = vlaneseq
        %v518 = vshrl.u32 %v517, 7
        %v519 = vsub.s32 %v516, %v518
        %v520 = vrot.slane %v512, %v519
        %v522 = vunpack.c.l.s4 1983009808
        %v523 = vunpack.c.0.s8 %v522
        %v524 = vlaneseq
        %v525 = vshrl.u32 %v524, 7
        %v526 = vsub.s32 %v523, %v525
        %v527 = vrot.slane %v513, %v526
        %v528 = vcombine.low %v504, %v520
        %v529 = vcombine.high %v504, %v520
        %v531 = vunpack.c.l.s4 1934713408
        %v532 = vunpack.c.0.s8 %v531
        %v533 = vlaneseq
        %v534 = vshrl.u32 %v533, 7
        %v535 = vsub.s32 %v532, %v534
        %v536 = vrot.slane %v528, %v535
        %v538 = vunpack.c.l.s4 1934713408
        %v539 = vunpack.c.0.s8 %v538
        %v540 = vlaneseq
        %v541 = vshrl.u32 %v540, 7
        %v542 = vsub.s32 %v539, %v541
        %v543 = vrot.slane %v529, %v542
        %v544 = vcombine.low %v511, %v527
        %v545 = vcombine.high %v511, %v527
        %v547 = vunpack.c.l.s4 1934713408
        %v548 = vunpack.c.0.s8 %v547
        %v549 = vlaneseq
        %v550 = vshrl.u32 %v549, 7
        %v551 = vsub.s32 %v548, %v550
        %v552 = vrot.slane %v544, %v551
        %v554 = vunpack.c.l.s4 1934713408
        %v555 = vunpack.c.0.s8 %v554
        %v556 = vlaneseq
        %v557 = vshrl.u32 %v556, 7
        %v558 = vsub.s32 %v555, %v557
        %v559 = vrot.slane %v545, %v558
        %v560 = vcombine.high %v536, 0.0
        %v561 = vcombine.high %v543, 0.0
        %v562 = vcombine.high %v552, 0.0
        %v563 = vcombine.high %v559, 0.0
        %v564 = vcombine.low %v536, %v543
        %v566 = vunpack.c.l.s4 1983009808
        %v567 = vunpack.c.0.s8 %v566
        %v568 = vlaneseq
        %v569 = vshrl.u32 %v568, 7
        %v570 = vsub.s32 %v567, %v569
        %v571 = vrot.slane %v564, %v570
        %v572 = vcombine.low %v560, %v561
        %v574 = vunpack.c.l.s4 1983009808
        %v575 = vunpack.c.0.s8 %v574
        %v576 = vlaneseq
        %v577 = vshrl.u32 %v576, 7
        %v578 = vsub.s32 %v575, %v577
        %v579 = vrot.slane %v572, %v578
        %v580 = vcombine.low %v552, %v559
        %v582 = vunpack.c.l.s4 1983009808
        %v583 = vunpack.c.0.s8 %v582
        %v584 = vlaneseq
        %v585 = vshrl.u32 %v584, 7
        %v586 = vsub.s32 %v583, %v585
        %v587 = vrot.slane %v580, %v586
        %v588 = vcombine.low %v562, %v563
        %v590 = vunpack.c.l.s4 1983009808
        %v591 = vunpack.c.0.s8 %v590
        %v592 = vlaneseq
        %v593 = vshrl.u32 %v592, 7
        %v594 = vsub.s32 %v591, %v593
        %v595 = vrot.slane %v588, %v594
        %v596 = vcombine.low %v571, %v579
        %v597 = vcombine.high %v571, %v579
        %v599 = vunpack.c.l.s4 1934713408
        %v600 = vunpack.c.0.s8 %v599
        %v601 = vlaneseq
        %v602 = vshrl.u32 %v601, 7
        %v603 = vsub.s32 %v600, %v602
        %v604 = vrot.slane %v596, %v603
        %v606 = vunpack.c.l.s4 1934713408
        %v607 = vunpack.c.0.s8 %v606
        %v608 = vlaneseq
        %v609 = vshrl.u32 %v608, 7
        %v610 = vsub.s32 %v607, %v609
        %v611 = vrot.slane %v597, %v610
        %v612 = vcombine.low %v587, %v595
        %v613 = vcombine.high %v587, %v595
        %v615 = vunpack.c.l.s4 1934713408
        %v616 = vunpack.c.0.s8 %v615
        %v617 = vlaneseq
        %v618 = vshrl.u32 %v617, 7
        %v619 = vsub.s32 %v616, %v618
        %v620 = vrot.slane %v612, %v619
        %v622 = vunpack.c.l.s4 1934713408
        %v623 = vunpack.c.0.s8 %v622
        %v624 = vlaneseq
        %v625 = vshrl.u32 %v624, 7
        %v626 = vsub.s32 %v623, %v625
        %v627 = vrot.slane %v613, %v626
        %v628 = vcombine.low %v604, %v620
        %v629 = vcombine.high %v604, %v620
        %v630 = vcombine.low %v611, %v627
        %v631 = vcombine.high %v611, %v627
        %v632 = vpack.c.bf16 %v628, %v628
        %v633 = vpack.c.bf16 %v629, %v629
        %v634 = vpack.c.bf16 %v630, %v630
        %v635 = vpack.c.bf16 %v631, %v631
        %vm636 = vcmask 60416
        %637 = vst.msk [vmem:[%s279] sm:$0xf] %vm636, %v632
        %638 = vst.msk [vmem:[%s279 + $0x4] sm:$0xf] %vm636, %v633
        %639 = vst.msk [vmem:[%s279 + $0x8] sm:$0xf] %vm636, %v634
        %640 = vst.msk [vmem:[%s279 + $0xc] sm:$0xf] %vm636, %v635
        %642 = vrot.lane.b32.xlu0 %v418, 120
        %v643 = vpop.permute.xlu0 %642
        %645 = vrot.lane.b32.xlu0 %v418, 112
        %v646 = vpop.permute.xlu0 %645
        %648 = vrot.lane.b32.xlu0 %v418, 104
        %v649 = vpop.permute.xlu0 %648
        %v651 = vcombine.low %v418, %v646
        %v652 = vcombine.high %v418, %v646
        %v654 = vunpack.c.l.s4 1983009808
        %v655 = vunpack.c.0.s8 %v654
        %v656 = vlaneseq
        %v657 = vshrl.u32 %v656, 7
        %v658 = vsub.s32 %v655, %v657
        %v659 = vrot.slane %v651, %v658
        %v661 = vunpack.c.l.s4 1983009808
        %v662 = vunpack.c.0.s8 %v661
        %v663 = vlaneseq
        %v664 = vshrl.u32 %v663, 7
        %v665 = vsub.s32 %v662, %v664
        %v666 = vrot.slane %v652, %v665
        %v667 = vcombine.low %v643, %v649
        %v668 = vcombine.high %v643, %v649
        %v670 = vunpack.c.l.s4 1983009808
        %v671 = vunpack.c.0.s8 %v670
        %v672 = vlaneseq
        %v673 = vshrl.u32 %v672, 7
        %v674 = vsub.s32 %v671, %v673
        %v675 = vrot.slane %v667, %v674
        %v677 = vunpack.c.l.s4 1983009808
        %v678 = vunpack.c.0.s8 %v677
        %v679 = vlaneseq
        %v680 = vshrl.u32 %v679, 7
        %v681 = vsub.s32 %v678, %v680
        %v682 = vrot.slane %v668, %v681
        %v683 = vcombine.low %v659, %v675
        %v684 = vcombine.high %v659, %v675
        %v686 = vunpack.c.l.s4 1934713408
        %v687 = vunpack.c.0.s8 %v686
        %v688 = vlaneseq
        %v689 = vshrl.u32 %v688, 7
        %v690 = vsub.s32 %v687, %v689
        %v691 = vrot.slane %v683, %v690
        %v693 = vunpack.c.l.s4 1934713408
        %v694 = vunpack.c.0.s8 %v693
        %v695 = vlaneseq
        %v696 = vshrl.u32 %v695, 7
        %v697 = vsub.s32 %v694, %v696
        %v698 = vrot.slane %v684, %v697
        %v699 = vcombine.low %v666, %v682
        %v700 = vcombine.high %v666, %v682
        %v702 = vunpack.c.l.s4 1934713408
        %v703 = vunpack.c.0.s8 %v702
        %v704 = vlaneseq
        %v705 = vshrl.u32 %v704, 7
        %v706 = vsub.s32 %v703, %v705
        %v707 = vrot.slane %v699, %v706
        %v709 = vunpack.c.l.s4 1934713408
        %v710 = vunpack.c.0.s8 %v709
        %v711 = vlaneseq
        %v712 = vshrl.u32 %v711, 7
        %v713 = vsub.s32 %v710, %v712
        %v714 = vrot.slane %v700, %v713
        %v715 = vcombine.high %v691, 0.0
        %v716 = vcombine.high %v698, 0.0
        %v717 = vcombine.high %v707, 0.0
        %v718 = vcombine.high %v714, 0.0
        %v719 = vcombine.low %v691, %v698
        %v721 = vunpack.c.l.s4 1983009808
        %v722 = vunpack.c.0.s8 %v721
        %v723 = vlaneseq
        %v724 = vshrl.u32 %v723, 7
        %v725 = vsub.s32 %v722, %v724
        %v726 = vrot.slane %v719, %v725
        %v727 = vcombine.low %v715, %v716
        %v729 = vunpack.c.l.s4 1983009808
        %v730 = vunpack.c.0.s8 %v729
        %v731 = vlaneseq
        %v732 = vshrl.u32 %v731, 7
        %v733 = vsub.s32 %v730, %v732
        %v734 = vrot.slane %v727, %v733
        %v735 = vcombine.low %v707, %v714
        %v737 = vunpack.c.l.s4 1983009808
        %v738 = vunpack.c.0.s8 %v737
        %v739 = vlaneseq
        %v740 = vshrl.u32 %v739, 7
        %v741 = vsub.s32 %v738, %v740
        %v742 = vrot.slane %v735, %v741
        %v743 = vcombine.low %v717, %v718
        %v745 = vunpack.c.l.s4 1983009808
        %v746 = vunpack.c.0.s8 %v745
        %v747 = vlaneseq
        %v748 = vshrl.u32 %v747, 7
        %v749 = vsub.s32 %v746, %v748
        %v750 = vrot.slane %v743, %v749
        %v751 = vcombine.low %v726, %v734
        %v752 = vcombine.high %v726, %v734
        %v754 = vunpack.c.l.s4 1934713408
        %v755 = vunpack.c.0.s8 %v754
        %v756 = vlaneseq
        %v757 = vshrl.u32 %v756, 7
        %v758 = vsub.s32 %v755, %v757
        %v759 = vrot.slane %v751, %v758
        %v761 = vunpack.c.l.s4 1934713408
        %v762 = vunpack.c.0.s8 %v761
        %v763 = vlaneseq
        %v764 = vshrl.u32 %v763, 7
        %v765 = vsub.s32 %v762, %v764
        %v766 = vrot.slane %v752, %v765
        %v767 = vcombine.low %v742, %v750
        %v768 = vcombine.high %v742, %v750
        %v770 = vunpack.c.l.s4 1934713408
        %v771 = vunpack.c.0.s8 %v770
        %v772 = vlaneseq
        %v773 = vshrl.u32 %v772, 7
        %v774 = vsub.s32 %v771, %v773
        %v775 = vrot.slane %v767, %v774
        %v777 = vunpack.c.l.s4 1934713408
        %v778 = vunpack.c.0.s8 %v777
        %v779 = vlaneseq
        %v780 = vshrl.u32 %v779, 7
        %v781 = vsub.s32 %v778, %v780
        %v782 = vrot.slane %v768, %v781
        %v783 = vcombine.low %v759, %v775
        %v784 = vcombine.high %v759, %v775
        %v785 = vcombine.low %v766, %v782
        %v786 = vcombine.high %v766, %v782
        %v787 = vpack.c.bf16 %v783, %v783
        %v788 = vpack.c.bf16 %v784, %v784
        %v789 = vpack.c.bf16 %v785, %v785
        %v790 = vpack.c.bf16 %v786, %v786
        %791 = vst.msk [vmem:[%s286] sm:$0xf] %vm636, %v787
        %792 = vst.msk [vmem:[%s286 + $0x4] sm:$0xf] %vm636, %v788
        %793 = vst.msk [vmem:[%s286 + $0x8] sm:$0xf] %vm636, %v789
        %794 = vst.msk [vmem:[%s286 + $0xc] sm:$0xf] %vm636, %v790
        %796 = vrot.lane.b32.xlu0 %v480, 120
        %v797 = vpop.permute.xlu0 %796
        %799 = vrot.lane.b32.xlu0 %v480, 112
        %v800 = vpop.permute.xlu0 %799
        %802 = vrot.lane.b32.xlu0 %v480, 104
        %v803 = vpop.permute.xlu0 %802
        %v805 = vcombine.low %v480, %v800
        %v806 = vcombine.high %v480, %v800
        %v808 = vunpack.c.l.s4 1983009808
        %v809 = vunpack.c.0.s8 %v808
        %v810 = vlaneseq
        %v811 = vshrl.u32 %v810, 7
        %v812 = vsub.s32 %v809, %v811
        %v813 = vrot.slane %v805, %v812
        %v815 = vunpack.c.l.s4 1983009808
        %v816 = vunpack.c.0.s8 %v815
        %v817 = vlaneseq
        %v818 = vshrl.u32 %v817, 7
        %v819 = vsub.s32 %v816, %v818
        %v820 = vrot.slane %v806, %v819
        %v821 = vcombine.low %v797, %v803
        %v822 = vcombine.high %v797, %v803
        %v824 = vunpack.c.l.s4 1983009808
        %v825 = vunpack.c.0.s8 %v824
        %v826 = vlaneseq
        %v827 = vshrl.u32 %v826, 7
        %v828 = vsub.s32 %v825, %v827
        %v829 = vrot.slane %v821, %v828
        %v831 = vunpack.c.l.s4 1983009808
        %v832 = vunpack.c.0.s8 %v831
        %v833 = vlaneseq
        %v834 = vshrl.u32 %v833, 7
        %v835 = vsub.s32 %v832, %v834
        %v836 = vrot.slane %v822, %v835
        %v837 = vcombine.low %v813, %v829
        %v838 = vcombine.high %v813, %v829
        %v840 = vunpack.c.l.s4 1934713408
        %v841 = vunpack.c.0.s8 %v840
        %v842 = vlaneseq
        %v843 = vshrl.u32 %v842, 7
        %v844 = vsub.s32 %v841, %v843
        %v845 = vrot.slane %v837, %v844
        %v847 = vunpack.c.l.s4 1934713408
        %v848 = vunpack.c.0.s8 %v847
        %v849 = vlaneseq
        %v850 = vshrl.u32 %v849, 7
        %v851 = vsub.s32 %v848, %v850
        %v852 = vrot.slane %v838, %v851
        %v853 = vcombine.low %v820, %v836
        %v854 = vcombine.high %v820, %v836
        %v856 = vunpack.c.l.s4 1934713408
        %v857 = vunpack.c.0.s8 %v856
        %v858 = vlaneseq
        %v859 = vshrl.u32 %v858, 7
        %v860 = vsub.s32 %v857, %v859
        %v861 = vrot.slane %v853, %v860
        %v863 = vunpack.c.l.s4 1934713408
        %v864 = vunpack.c.0.s8 %v863
        %v865 = vlaneseq
        %v866 = vshrl.u32 %v865, 7
        %v867 = vsub.s32 %v864, %v866
        %v868 = vrot.slane %v854, %v867
        %v869 = vcombine.high %v845, 0.0
        %v870 = vcombine.high %v852, 0.0
        %v871 = vcombine.high %v861, 0.0
        %v872 = vcombine.high %v868, 0.0
        %v873 = vcombine.low %v845, %v852
        %v875 = vunpack.c.l.s4 1983009808
        %v876 = vunpack.c.0.s8 %v875
        %v877 = vlaneseq
        %v878 = vshrl.u32 %v877, 7
        %v879 = vsub.s32 %v876, %v878
        %v880 = vrot.slane %v873, %v879
        %v881 = vcombine.low %v869, %v870
        %v883 = vunpack.c.l.s4 1983009808
        %v884 = vunpack.c.0.s8 %v883
        %v885 = vlaneseq
        %v886 = vshrl.u32 %v885, 7
        %v887 = vsub.s32 %v884, %v886
        %v888 = vrot.slane %v881, %v887
        %v889 = vcombine.low %v861, %v868
        %v891 = vunpack.c.l.s4 1983009808
        %v892 = vunpack.c.0.s8 %v891
        %v893 = vlaneseq
        %v894 = vshrl.u32 %v893, 7
        %v895 = vsub.s32 %v892, %v894
        %v896 = vrot.slane %v889, %v895
        %v897 = vcombine.low %v871, %v872
        %v899 = vunpack.c.l.s4 1983009808
        %v900 = vunpack.c.0.s8 %v899
        %v901 = vlaneseq
        %v902 = vshrl.u32 %v901, 7
        %v903 = vsub.s32 %v900, %v902
        %v904 = vrot.slane %v897, %v903
        %v905 = vcombine.low %v880, %v888
        %v906 = vcombine.high %v880, %v888
        %v908 = vunpack.c.l.s4 1934713408
        %v909 = vunpack.c.0.s8 %v908
        %v910 = vlaneseq
        %v911 = vshrl.u32 %v910, 7
        %v912 = vsub.s32 %v909, %v911
        %v913 = vrot.slane %v905, %v912
        %v915 = vunpack.c.l.s4 1934713408
        %v916 = vunpack.c.0.s8 %v915
        %v917 = vlaneseq
        %v918 = vshrl.u32 %v917, 7
        %v919 = vsub.s32 %v916, %v918
        %v920 = vrot.slane %v906, %v919
        %v921 = vcombine.low %v896, %v904
        %v922 = vcombine.high %v896, %v904
        %v924 = vunpack.c.l.s4 1934713408
        %v925 = vunpack.c.0.s8 %v924
        %v926 = vlaneseq
        %v927 = vshrl.u32 %v926, 7
        %v928 = vsub.s32 %v925, %v927
        %v929 = vrot.slane %v921, %v928
        %v931 = vunpack.c.l.s4 1934713408
        %v932 = vunpack.c.0.s8 %v931
        %v933 = vlaneseq
        %v934 = vshrl.u32 %v933, 7
        %v935 = vsub.s32 %v932, %v934
        %v936 = vrot.slane %v922, %v935
        %v937 = vcombine.low %v913, %v929
        %v938 = vcombine.high %v913, %v929
        %v939 = vcombine.low %v920, %v936
        %v940 = vcombine.high %v920, %v936
        %v941 = vpack.c.bf16 %v937, %v937
        %v942 = vpack.c.bf16 %v938, %v938
        %v943 = vpack.c.bf16 %v939, %v939
        %v944 = vpack.c.bf16 %v940, %v940
        %945 = vst.msk [vmem:[%s293] sm:$0xf] %vm636, %v941
        %946 = vst.msk [vmem:[%s293 + $0x4] sm:$0xf] %vm636, %v942
        %947 = vst.msk [vmem:[%s293 + $0x8] sm:$0xf] %vm636, %v943
        %948 = vst.msk [vmem:[%s293 + $0xc] sm:$0xf] %vm636, %v944
        %s949 = sand.u32 %s119, 1
        %s950 = scalar_lea.sflag [#allocation4], %s949
        %s951 = sand.u32 %s119, 1
        %s952 = smul.addr %s951, 16
        %s953 = scalar_lea.vmem [#allocation7], %s952
        %s954 = sand.u32 %s27, 1
        %s955 = scalar_lea.sflag [#allocation9], %s954
        %s956 = sand.u32 %s147, 1
        %s957 = smul.addr %s956, 16
        %s958 = scalar_lea.vmem [#allocation8], %s957
        %s959 = sand.u32 %s27, 1
        %s960 = scalar_lea.sflag [#allocation9], %s959
        %s961 = sand.u32 %s175, 1
        %s962 = smul.addr %s961, 16
        %s963 = scalar_lea.vmem [#allocation10], %s962
        // Predicated region
        $region41: #{tpu_custom_call.1} parent=31 // pred_check
          %p964 = pneg %p129
        $region42: #{tpu_custom_call.1} parent=31 // pred_check_branch
          %966 = sbr.rel (%p964) target = $region44
        $region43: #{tpu_custom_call.1} parent=31 // pred_region
          %s968 = ssub.s32 256, 256
          %969 = vsyncadd %s950, %s968
          %s970 = smul.addr %s31, 4
          %s971 = sadd.s32 %s32, %s970
          %s972 = smul.addr %s971, 64
          %s973 = scalar_lea.hbm %s3, %s972
          %s974 = sshll.u32 %s953, 4
          %s975 = int_to_ptr.vmem [resolvable:$true] %s974
          %980 = dma.vmem_to_hbm [thread:$0]  %s975, 256, %s973, %s950, 64, 64, 4
        $region44: #{tpu_custom_call.1} parent=31 // pred_fallthru
          _
        // Predicated region
        $region45: #{tpu_custom_call.1} parent=31 // pred_check
          %p981 = pneg %p157
        $region46: #{tpu_custom_call.1} parent=31 // pred_check_branch
          %983 = sbr.rel (%p981) target = $region48
        $region47: #{tpu_custom_call.1} parent=31 // pred_region
          %s985 = ssub.s32 256, 256
          %986 = vsyncadd %s955, %s985
          %s987 = smul.addr %s31, 4
          %s988 = sadd.s32 %s32, %s987
          %s989 = smul.addr %s988, 64
          %s990 = scalar_lea.hbm %s4, %s989
          %s991 = sshll.u32 %s958, 4
          %s992 = int_to_ptr.vmem [resolvable:$true] %s991
          %997 = dma.vmem_to_hbm [thread:$0]  %s992, 256, %s990, %s955, 64, 64, 4
        $region48: #{tpu_custom_call.1} parent=31 // pred_fallthru
          _
        // Predicated region
        $region49: #{tpu_custom_call.1} parent=31 // pred_check
          %p998 = pneg %p185
        $region50: #{tpu_custom_call.1} parent=31 // pred_check_branch
          %1000 = sbr.rel (%p998) target = $region52
        $region51: #{tpu_custom_call.1} parent=31 // pred_region
          %s1002 = ssub.s32 256, 256
          %1003 = vsyncadd %s960, %s1002
          %s1004 = smul.addr %s31, 4
          %s1005 = sadd.s32 %s32, %s1004
          %s1006 = smul.addr %s1005, 64
          %s1007 = scalar_lea.hbm %s5, %s1006
          %s1008 = sshll.u32 %s963, 4
          %s1009 = int_to_ptr.vmem [resolvable:$true] %s1008
          %1014 = dma.vmem_to_hbm [thread:$0]  %s1009, 256, %s1007, %s960, 64, 64, 4
        $region52: #{tpu_custom_call.1} parent=31 // pred_fallthru
          _
      $region32: #{tpu_custom_call.1} parent=5 // pred_fallthru
        _
      %p1015 = scmp.le.s32.totalorder 2, %s22
      // Predicated region
      $region53: #{tpu_custom_call.1} parent=5 // pred_check
        %p1016 = pneg %p1015
      $region54: #{tpu_custom_call.1} parent=5 // pred_check_branch
        %1018 = sbr.rel (%p1016) target = $region56
      $region55: #{tpu_custom_call.1} parent=5 // pred_region
        %s1019 = ssub.s32 %s22, 2
        // Predicated region
        $region57: #{tpu_custom_call.1} parent=55 // pred_check
          %p1020 = pneg %p135
        $region58: #{tpu_custom_call.1} parent=55 // pred_check_branch
          %1022 = sbr.rel (%p1020) target = $region60
        $region59: #{tpu_custom_call.1} parent=55 // pred_region
          %s1023 = sand.u32 %s120, 1
          %s1024 = scalar_lea.sflag [#allocation4], %s1023
          %s1025 = sand.u32 %s120, 1
          %s1026 = smul.addr %s1025, 16
          %s1027 = scalar_lea.vmem [#allocation7], %s1026
          %1028 = dma.done %s1024, 256
        $region60: #{tpu_custom_call.1} parent=55 // pred_fallthru
          _
        // Predicated region
        $region61: #{tpu_custom_call.1} parent=55 // pred_check
          %p1029 = pneg %p163
        $region62: #{tpu_custom_call.1} parent=55 // pred_check_branch
          %1031 = sbr.rel (%p1029) target = $region64
        $region63: #{tpu_custom_call.1} parent=55 // pred_region
          %s1032 = sand.u32 %s28, 1
          %s1033 = scalar_lea.sflag [#allocation9], %s1032
          %s1034 = sand.u32 %s148, 1
          %s1035 = smul.addr %s1034, 16
          %s1036 = scalar_lea.vmem [#allocation8], %s1035
          %1037 = dma.done %s1033, 256
        $region64: #{tpu_custom_call.1} parent=55 // pred_fallthru
          _
        // Predicated region
        $region65: #{tpu_custom_call.1} parent=55 // pred_check
          %p1038 = pneg %p191
        $region66: #{tpu_custom_call.1} parent=55 // pred_check_branch
          %1040 = sbr.rel (%p1038) target = $region68
        $region67: #{tpu_custom_call.1} parent=55 // pred_region
          %s1041 = sand.u32 %s28, 1
          %s1042 = scalar_lea.sflag [#allocation9], %s1041
          %s1043 = sand.u32 %s176, 1
          %s1044 = smul.addr %s1043, 16
          %s1045 = scalar_lea.vmem [#allocation10], %s1044
          %1046 = dma.done %s1042, 256
        $region68: #{tpu_custom_call.1} parent=55 // pred_fallthru
          _
      $region56: #{tpu_custom_call.1} parent=5 // pred_fallthru
        _
    $region6: #{tpu_custom_call.1} parent=1 // loop_footer
      %s26 = sadd.s32 1, %s22
    $region7: #{tpu_custom_call.1} parent=1 // loop_footer_branch
      %21 = sbr.rel target = $region3
    $region8: #{tpu_custom_call.1} parent=1 // loop_exit
      _
    %1047 = vsyncpa [#allocation3], 1
    %s1048 = scalar_lea.sflag [#allocation3], 1
    %1049 = vsyncpa %s1048, 1
    %1050 = vsyncpa [#allocation6], 1
    %1051 = vsyncpa [#allocation4], 1
    %s1052 = scalar_lea.sflag [#allocation4], 1
    %1053 = vsyncpa %s1052, 1
    %1054 = vsyncpa [#allocation9], 1
    %s1055 = scalar_lea.sflag [#allocation9], 1
    %1056 = vsyncpa %s1055, 1

</llo_original>
